<compile_context>
chip_gen: v7x
topology: tpu7x:2x2x1
jax: 0.10.0
libtpu: 0.0.40
codegen_flags: <defaults>
</compile_context>

<pallas_src>
import functools

import jax
import jax.numpy as jnp
from jax.experimental import pallas as pl
from jax.experimental.pallas import tpu as pltpu


def _round_up(x: int, m: int) -> int:
    return ((x + m - 1) // m) * m


def _round_down(x: int, m: int) -> int:
    return (x // m) * m


def resnet_block_kernel(x_ref, w1_ref, b1_ref, w2_ref, b2_ref, o_ref, *, act_dtype):
    x = x_ref[...]                                           # (TM, dim_p) f32
    w_dtype = w1_ref.dtype

    # lin1: (TM, dim_p) @ (dim_p, width_p) + (1, width_p), f32 MXU accumulation.
    h = jnp.dot(x.astype(w_dtype), w1_ref[...],
                preferred_element_type=jnp.float32) + b1_ref[...]

    # Mish(h) = h * tanh(softplus(h)); tanh(softplus(h)) = (s-1)/(s+1) with
    # s = (1+e^h)^2. Cancellation-free: s-1 = t*(t+2), s+1 = t*(t+2)+2, t=e^h.
    # Clamp at h=20 where the factor is exactly 1.0 in f32 (mish(h) == h).
    # One EUP exp + one EUP approx reciprocal (+1 VALU Newton step) per elem —
    # the full-precision divide is gone from the binding VALU slot.
    t = jnp.exp(jnp.minimum(h, 20.0).astype(act_dtype))
    num = (t * (t + 2.0)).astype(jnp.float32)                # s - 1  (>= 0)
    den = num + 2.0                                          # s + 1  (>= 2)
    r = pl.reciprocal(den, approx=True)                      # EUP vrcp
    r = r * (2.0 - den * r)                                  # one Newton step
    a = (h * num) * r                                        # f32 Mish(h)

    # lin2: (TM, width_p) @ (width_p, dim_p) + (1, dim_p), f32 MXU accumulation.
    y = jnp.dot(a.astype(w_dtype), w2_ref[...],
                preferred_element_type=jnp.float32) + b2_ref[...]

    # Residual add in f32.
    o_ref[...] = x + y


def _pallas_forward(x_p, w1_p, b1_p, w2_p, b2_p, *, TM, dim_p, width_p, grid,
                    vmem_limit, cost, act_dtype, single_buffer_weights):
    # Constant-index_map operands stay VMEM resident across the grid; single
    # buffering them (pl.Buffered(1)) halves their VMEM footprint.
    wkw = dict(pipeline_mode=pl.Buffered(1)) if single_buffer_weights else {}
    in_specs = [
        pl.BlockSpec((TM, dim_p), lambda i: (i, 0)),              # x tile (pipelined)
        pl.BlockSpec((dim_p, width_p), lambda i: (0, 0), **wkw),  # W1 resident
        pl.BlockSpec((1, width_p), lambda i: (0, 0), **wkw),      # b1 resident
        pl.BlockSpec((width_p, dim_p), lambda i: (0, 0), **wkw),  # W2 resident
        pl.BlockSpec((1, dim_p), lambda i: (0, 0), **wkw),        # b2 resident
    ]
    return pl.pallas_call(
        functools.partial(resnet_block_kernel, act_dtype=act_dtype),
        out_shape=jax.ShapeDtypeStruct((x_p.shape[0], dim_p), jnp.float32),
        grid_spec=pltpu.PrefetchScalarGridSpec(
            num_scalar_prefetch=0,
            grid=grid,
            in_specs=in_specs,
            out_specs=pl.BlockSpec((TM, dim_p), lambda i: (i, 0)),
        ),
        compiler_params=pltpu.CompilerParams(
            dimension_semantics=("parallel",),   # batch tiles -> both TCs on v7x
            vmem_limit_bytes=int(vmem_limit),
        ),
        cost_estimate=cost,
    )(x_p, w1_p, b1_p, w2_p, b2_p)


def resnet_block(x, w1, b1, w2, b2, *, tm: int = 512,
                 weight_dtype=jnp.bfloat16, act_dtype=None):
    """y = x + lin2(mish(lin1(x))).

    weight_dtype: MXU input dtype for W1/W2 and the casted activations (bf16
      default — native MXU dtype on every generation, f32 accumulation).
    act_dtype: dtype of the elementwise Mish math. f32 default (required on
      v5e); pass jnp.bfloat16 on v6e/v7x to halve the VALU/EUP op count.
    """
    if act_dtype is None:
        act_dtype = jnp.float32

    B, dim = x.shape
    width = w1.shape[1]

    # Lane padding to 128 (exact: padded weight rows/cols and biases are zero
    # and mish(0) == 0). Batch padded only to a sublane multiple of 8, NOT to
    # TM — the last grid block overhangs and its rows are masked on store.
    dim_p = _round_up(dim, 128)
    width_p = _round_up(width, 128)
    B_p = _round_up(B, 8)

    x_p = x if x.dtype == jnp.float32 else x.astype(jnp.float32)
    if (B_p, dim_p) != (B, dim):
        x_p = jnp.pad(x_p, ((0, B_p - B), (0, dim_p - dim)))
    w1_p = w1 if (dim_p, width_p) == (dim, width) else jnp.pad(
        w1, ((0, dim_p - dim), (0, width_p - width)))
    w2_p = w2 if (dim_p, width_p) == (dim, width) else jnp.pad(
        w2, ((0, width_p - width), (0, dim_p - dim)))
    w1_p = w1_p.astype(weight_dtype)
    w2_p = w2_p.astype(weight_dtype)
    b1_p = b1.reshape(1, width).astype(jnp.float32)
    if width_p != width:
        b1_p = jnp.pad(b1_p, ((0, 0), (0, width_p - width)))
    b2_p = b2.reshape(1, dim).astype(jnp.float32)
    if dim_p != dim:
        b2_p = jnp.pad(b2_p, ((0, 0), (0, dim_p - dim)))

    # Row tile: multiple of 8, at least 2 grid blocks when B allows (so the
    # "parallel" batch axis feeds both v7x TensorCores), auto-scaled down so
    # the working set fits the generation-aware VMEM budget.
    TM = max(8, min(_round_up(tm, 8), _round_up(pl.cdiv(B_p, 2), 8)))

    w_item = jnp.dtype(weight_dtype).itemsize
    weight_bytes = 2 * dim_p * width_p * w_item + (width_p + dim_p) * 4
    try:
        vmem_cap = pltpu.get_tpu_info().vmem_capacity_bytes
    except Exception:
        vmem_cap = 64 * 1024 * 1024          # v7x per-TC size: safe everywhere
    budget = int(0.80 * vmem_cap)

    # Per-row VMEM: double-buffered x/out tiles + f32 h/a intermediates + slack.
    act_bytes_per_row = (2 * 2 * dim_p + 4 * width_p) * 4
    avail = budget - 2 * weight_bytes        # worst case: double-buffered weights
    if avail > 0:
        TM = min(TM, max(8, _round_down(avail // act_bytes_per_row, 8)))

    grid = (pl.cdiv(B_p, TM),)

    need = 2 * weight_bytes + TM * act_bytes_per_row
    vmem_limit = min(max(2 * need, 32 * 1024 * 1024), budget)
    if vmem_limit < need:
        # Never silently clamp below the actual need.
        # TODO(synk): width-tiled fallback (stream W1/W2 K-tiles, accumulate a
        # (TM, dim_p) VMEM scratch via pl.when init/finalize) for the case
        # where resident weights alone exceed the VMEM budget (large widths,
        # especially on v7x's 64 MiB VMEM).
        vmem_limit = min(need, int(0.95 * vmem_cap))

    cost = pl.CostEstimate(
        flops=2 * 2 * B_p * dim_p * width_p,          # two matmuls
        transcendentals=2 * B_p * width_p,            # exp + approx reciprocal
        bytes_accessed=(2 * B_p * dim_p * 4           # x in + out
                        + 2 * dim_p * width_p * w_item
                        + (width_p + dim_p) * 4),
    )

    kwargs = dict(TM=TM, dim_p=dim_p, width_p=width_p, grid=grid,
                  vmem_limit=vmem_limit, cost=cost, act_dtype=act_dtype)
    try:
        out_p = _pallas_forward(x_p, w1_p, b1_p, w2_p, b2_p,
                                single_buffer_weights=True, **kwargs)
    except Exception:
        # Older JAX without pipeline_mode/Buffered(1): default double buffering.
        out_p = _pallas_forward(x_p, w1_p, b1_p, w2_p, b2_p,
                                single_buffer_weights=False, **kwargs)

    if (B_p, dim_p) != (B, dim):
        out_p = out_p[:B, :dim]
    return out_p


def init_params(key, dim, width):
    """kaiming_normal_(mode='fan_out', nonlinearity='relu'), zero biases.

    PyTorch lin1.weight (width, dim) -> fan_out = width, std = sqrt(2/width).
    PyTorch lin2.weight (dim, width) -> fan_out = dim,   std = sqrt(2/dim).
    We store the transposed (in, out) versions for the kernel.
    """
    k1, k2 = jax.random.split(key)
    std1 = (2.0 / width) ** 0.5
    std2 = (2.0 / dim) ** 0.5
    w1_pt = jax.random.normal(k1, (width, dim), jnp.float32) * std1
    w2_pt = jax.random.normal(k2, (dim, width), jnp.float32) * std2
    w1 = w1_pt.T                      # (dim, width)
    w2 = w2_pt.T                      # (width, dim)
    b1 = jnp.zeros((1, width), jnp.float32)
    b2 = jnp.zeros((1, dim), jnp.float32)
    return w1, b1, w2, b2


if __name__ == "__main__":
    # Small shapes consistent with ResNetBlock(dim, width): x is (B, dim).
    # B=40 deliberately exercises the overhanging (masked) last batch block.
    B, dim, width = 40, 32, 64
    key = jax.random.PRNGKey(0)
    kx, kp = jax.random.split(key)
    x = jax.random.normal(kx, (B, dim), jnp.float32)
    w1, b1, w2, b2 = init_params(kp, dim, width)

    # Exact pure-JAX reference (exact Mish).
    h = x @ w1 + b1
    ref = x + (h * jnp.tanh(jax.nn.softplus(h))) @ w2 + b2

    # 1) f32 weights + f32 elementwise math: tight correctness check.
    out_f32 = jax.block_until_ready(
        resnet_block(x, w1, b1, w2, b2, weight_dtype=jnp.float32))
    assert out_f32.shape == x.shape
    assert jnp.allclose(out_f32, ref, atol=2e-3, rtol=2e-3), "f32 mismatch vs reference"

    # 2) Default bf16 MXU inputs (f32 accumulation): relaxed (quantization) check.
    out_bf16 = jax.block_until_ready(resnet_block(x, w1, b1, w2, b2))
    rel = jnp.linalg.norm(out_bf16 - ref) / jnp.linalg.norm(ref)
    assert float(rel) < 3e-2, f"bf16 relative error too large: {float(rel)}"

    print("KERNEL_OK")
</pallas_src>

<mosaic_0001>
module attributes {stable_mosaic.version = 11 : i64} {
  func.func @resnet_block_kernel(%arg0: i32, %arg1: memref<24x128xf32, #tpu.memory_space<vmem>>, %arg2: memref<128x128xf32, #tpu.memory_space<vmem>>, %arg3: memref<1x128xf32, #tpu.memory_space<vmem>>, %arg4: memref<128x128xf32, #tpu.memory_space<vmem>>, %arg5: memref<1x128xf32, #tpu.memory_space<vmem>>, %arg6: memref<24x128xf32, #tpu.memory_space<vmem>>) attributes {dimension_semantics = [#tpu.dimension_semantics<parallel>], iteration_bounds = array<i64: 2>, scalar_prefetch = 0 : i64, scratch_operands = 0 : i64, tpu.core_type = #tpu.core_type<tc>, window_params = [{transform_indices = @transform_0, window_bounds = array<i64: 24, 128>}, {pipeline_mode = #tpu.pipeline_mode<synchronous>, transform_indices = @transform_1, window_bounds = array<i64: 128, 128>}, {pipeline_mode = #tpu.pipeline_mode<synchronous>, transform_indices = @transform_2, window_bounds = array<i64: 1, 128>}, {pipeline_mode = #tpu.pipeline_mode<synchronous>, transform_indices = @transform_3, window_bounds = array<i64: 128, 128>}, {pipeline_mode = #tpu.pipeline_mode<synchronous>, transform_indices = @transform_4, window_bounds = array<i64: 1, 128>}, {transform_indices = @transform_5, window_bounds = array<i64: 24, 128>}]} {
    %c0 = arith.constant 0 : index
    %c0_0 = arith.constant 0 : index
    %0 = vector.load %arg1[%c0, %c0_0] : memref<24x128xf32, #tpu.memory_space<vmem>>, vector<24x128xf32>
    %c0_1 = arith.constant 0 : index
    %c0_2 = arith.constant 0 : index
    %1 = vector.load %arg2[%c0_1, %c0_2] : memref<128x128xf32, #tpu.memory_space<vmem>>, vector<128x128xf32>
    %cst = arith.constant dense<0.000000e+00> : vector<24x128xf32>
    %2 = tpu.matmul %0, %1, %cst {dimension_numbers = #tpu.dot_dimension_numbers<[1], [0], [0], [1], [0, 0, 1, 1], [], []>} : vector<24x128xf32>, vector<128x128xf32>, vector<24x128xf32> -> vector<24x128xf32>
    %c0_3 = arith.constant 0 : index
    %c0_4 = arith.constant 0 : index
    %3 = vector.load %arg3[%c0_3, %c0_4] : memref<1x128xf32, #tpu.memory_space<vmem>>, vector<1x128xf32>
    %4 = vector.broadcast %3 : vector<1x128xf32> to vector<24x128xf32>
    %5 = arith.addf %2, %4 : vector<24x128xf32>
    %cst_5 = arith.constant 2.000000e+01 : f32
    %6 = vector.broadcast %cst_5 : f32 to vector<24x128xf32>
    %7 = arith.minimumf %5, %6 : vector<24x128xf32>
    %8 = math.exp %7 : vector<24x128xf32>
    %cst_6 = arith.constant 2.000000e+00 : f32
    %9 = vector.broadcast %cst_6 : f32 to vector<24x128xf32>
    %10 = arith.addf %8, %9 : vector<24x128xf32>
    %11 = arith.mulf %8, %10 : vector<24x128xf32>
    %cst_7 = arith.constant 2.000000e+00 : f32
    %12 = vector.broadcast %cst_7 : f32 to vector<24x128xf32>
    %13 = arith.addf %11, %12 : vector<24x128xf32>
    %14 = tpu.reciprocal %13 {approx = true} : vector<24x128xf32> -> vector<24x128xf32>
    %15 = arith.mulf %13, %14 : vector<24x128xf32>
    %cst_8 = arith.constant 2.000000e+00 : f32
    %16 = vector.broadcast %cst_8 : f32 to vector<24x128xf32>
    %17 = arith.subf %16, %15 : vector<24x128xf32>
    %18 = arith.mulf %14, %17 : vector<24x128xf32>
    %19 = arith.mulf %5, %11 : vector<24x128xf32>
    %20 = arith.mulf %19, %18 : vector<24x128xf32>
    %c0_9 = arith.constant 0 : index
    %c0_10 = arith.constant 0 : index
    %21 = vector.load %arg4[%c0_9, %c0_10] : memref<128x128xf32, #tpu.memory_space<vmem>>, vector<128x128xf32>
    %cst_11 = arith.constant dense<0.000000e+00> : vector<24x128xf32>
    %22 = tpu.matmul %20, %21, %cst_11 {dimension_numbers = #tpu.dot_dimension_numbers<[1], [0], [0], [1], [0, 0, 1, 1], [], []>} : vector<24x128xf32>, vector<128x128xf32>, vector<24x128xf32> -> vector<24x128xf32>
    %c0_12 = arith.constant 0 : index
    %c0_13 = arith.constant 0 : index
    %23 = vector.load %arg5[%c0_12, %c0_13] : memref<1x128xf32, #tpu.memory_space<vmem>>, vector<1x128xf32>
    %24 = vector.broadcast %23 : vector<1x128xf32> to vector<24x128xf32>
    %25 = arith.addf %22, %24 : vector<24x128xf32>
    %26 = arith.addf %0, %25 : vector<24x128xf32>
    %c0_14 = arith.constant 0 : index
    %c0_15 = arith.constant 0 : index
    %27 = vector.load %arg6[%c0_14, %c0_15] : memref<24x128xf32, #tpu.memory_space<vmem>>, vector<24x128xf32>
    tpu.vector_store %arg6[%c0_14, %c0_15], %26 {strides = array<i32>} : memref<24x128xf32, #tpu.memory_space<vmem>>, vector<24x128xf32>,
    return
  }
  func.func @transform_0(%arg0: i32) -> (i32, i32) {
    %c0_i32 = arith.constant 0 : i32
    %c0_i32_0 = arith.constant 0 : i32
    return %arg0, %c0_i32 : i32, i32
  }
  func.func @transform_1(%arg0: i32) -> (i32, i32) {
    %c0_i32 = arith.constant 0 : i32
    %c0_i32_0 = arith.constant 0 : i32
    %c0_i32_1 = arith.constant 0 : i32
    return %c0_i32, %c0_i32_0 : i32, i32
  }
  func.func @transform_2(%arg0: i32) -> (i32, i32) {
    %c0_i32 = arith.constant 0 : i32
    %c0_i32_0 = arith.constant 0 : i32
    %c0_i32_1 = arith.constant 0 : i32
    return %c0_i32, %c0_i32_0 : i32, i32
  }
  func.func @transform_3(%arg0: i32) -> (i32, i32) {
    %c0_i32 = arith.constant 0 : i32
    %c0_i32_0 = arith.constant 0 : i32
    %c0_i32_1 = arith.constant 0 : i32
    return %c0_i32, %c0_i32_0 : i32, i32
  }
  func.func @transform_4(%arg0: i32) -> (i32, i32) {
    %c0_i32 = arith.constant 0 : i32
    %c0_i32_0 = arith.constant 0 : i32
    %c0_i32_1 = arith.constant 0 : i32
    return %c0_i32, %c0_i32_0 : i32, i32
  }
  func.func @transform_5(%arg0: i32) -> (i32, i32) {
    %c0_i32 = arith.constant 0 : i32
    %c0_i32_0 = arith.constant 0 : i32
    return %arg0, %c0_i32 : i32, i32
  }
}

module attributes {stable_mosaic.version = 11 : i64} {
  func.func @resnet_block_kernel(%arg0: i32, %arg1: memref<24x128xf32, #tpu.memory_space<vmem>>, %arg2: memref<128x128xf32, #tpu.memory_space<vmem>>, %arg3: memref<1x128xf32, #tpu.memory_space<vmem>>, %arg4: memref<128x128xf32, #tpu.memory_space<vmem>>, %arg5: memref<1x128xf32, #tpu.memory_space<vmem>>, %arg6: memref<24x128xf32, #tpu.memory_space<vmem>>) attributes {dimension_semantics = [#tpu.dimension_semantics<parallel>], iteration_bounds = array<i64: 2>, scalar_prefetch = 0 : i64, scratch_operands = 0 : i64, tpu.core_type = #tpu.core_type<tc>, window_params = [{transform_indices = @transform_0, window_bounds = array<i64: 24, 128>}, {pipeline_mode = #tpu.pipeline_mode<synchronous>, transform_indices = @transform_1, window_bounds = array<i64: 128, 128>}, {pipeline_mode = #tpu.pipeline_mode<synchronous>, transform_indices = @transform_2, window_bounds = array<i64: 1, 128>}, {pipeline_mode = #tpu.pipeline_mode<synchronous>, transform_indices = @transform_3, window_bounds = array<i64: 128, 128>}, {pipeline_mode = #tpu.pipeline_mode<synchronous>, transform_indices = @transform_4, window_bounds = array<i64: 1, 128>}, {transform_indices = @transform_5, window_bounds = array<i64: 24, 128>}]} {
    %c0 = arith.constant 0 : index
    %c0_0 = arith.constant 0 : index
    %0 = vector.load %arg1[%c0, %c0_0] : memref<24x128xf32, #tpu.memory_space<vmem>>, vector<24x128xf32>
    %c0_1 = arith.constant 0 : index
    %c0_2 = arith.constant 0 : index
    %1 = vector.load %arg2[%c0_1, %c0_2] : memref<128x128xf32, #tpu.memory_space<vmem>>, vector<128x128xf32>
    %cst = arith.constant dense<0.000000e+00> : vector<24x128xf32>
    %2 = tpu.matmul %0, %1, %cst {dimension_numbers = #tpu.dot_dimension_numbers<[1], [0], [0], [1], [0, 0, 1, 1], [], []>} : vector<24x128xf32>, vector<128x128xf32>, vector<24x128xf32> -> vector<24x128xf32>
    %c0_3 = arith.constant 0 : index
    %c0_4 = arith.constant 0 : index
    %3 = vector.load %arg3[%c0_3, %c0_4] : memref<1x128xf32, #tpu.memory_space<vmem>>, vector<1x128xf32>
    %4 = vector.broadcast %3 : vector<1x128xf32> to vector<24x128xf32>
    %5 = arith.addf %2, %4 : vector<24x128xf32>
    %cst_5 = arith.constant 2.000000e+01 : f32
    %6 = vector.broadcast %cst_5 : f32 to vector<24x128xf32>
    %7 = arith.minimumf %5, %6 : vector<24x128xf32>
    %8 = math.exp %7 : vector<24x128xf32>
    %cst_6 = arith.constant 2.000000e+00 : f32
    %9 = vector.broadcast %cst_6 : f32 to vector<24x128xf32>
    %10 = arith.addf %8, %9 : vector<24x128xf32>
    %11 = arith.mulf %8, %10 : vector<24x128xf32>
    %cst_7 = arith.constant 2.000000e+00 : f32
    %12 = vector.broadcast %cst_7 : f32 to vector<24x128xf32>
    %13 = arith.addf %11, %12 : vector<24x128xf32>
    %14 = tpu.reciprocal %13 {approx = true} : vector<24x128xf32> -> vector<24x128xf32>
    %15 = arith.mulf %13, %14 : vector<24x128xf32>
    %cst_8 = arith.constant 2.000000e+00 : f32
    %16 = vector.broadcast %cst_8 : f32 to vector<24x128xf32>
    %17 = arith.subf %16, %15 : vector<24x128xf32>
    %18 = arith.mulf %14, %17 : vector<24x128xf32>
    %19 = arith.mulf %5, %11 : vector<24x128xf32>
    %20 = arith.mulf %19, %18 : vector<24x128xf32>
    %c0_9 = arith.constant 0 : index
    %c0_10 = arith.constant 0 : index
    %21 = vector.load %arg4[%c0_9, %c0_10] : memref<128x128xf32, #tpu.memory_space<vmem>>, vector<128x128xf32>
    %cst_11 = arith.constant dense<0.000000e+00> : vector<24x128xf32>
    %22 = tpu.matmul %20, %21, %cst_11 {dimension_numbers = #tpu.dot_dimension_numbers<[1], [0], [0], [1], [0, 0, 1, 1], [], []>} : vector<24x128xf32>, vector<128x128xf32>, vector<24x128xf32> -> vector<24x128xf32>
    %c0_12 = arith.constant 0 : index
    %c0_13 = arith.constant 0 : index
    %23 = vector.load %arg5[%c0_12, %c0_13] : memref<1x128xf32, #tpu.memory_space<vmem>>, vector<1x128xf32>
    %24 = vector.broadcast %23 : vector<1x128xf32> to vector<24x128xf32>
    %25 = arith.addf %22, %24 : vector<24x128xf32>
    %26 = arith.addf %0, %25 : vector<24x128xf32>
    %c0_14 = arith.constant 0 : index
    %c0_15 = arith.constant 0 : index
    %27 = vector.load %arg6[%c0_14, %c0_15] : memref<24x128xf32, #tpu.memory_space<vmem>>, vector<24x128xf32>
    tpu.vector_store %arg6[%c0_14, %c0_15], %26 {strides = array<i32>} : memref<24x128xf32, #tpu.memory_space<vmem>>, vector<24x128xf32>,
    return
  }
  func.func @transform_0(%arg0: i32) -> (i32, i32) {
    %c0_i32 = arith.constant 0 : i32
    %c0_i32_0 = arith.constant 0 : i32
    return %arg0, %c0_i32 : i32, i32
  }
  func.func @transform_1(%arg0: i32) -> (i32, i32) {
    %c0_i32 = arith.constant 0 : i32
    %c0_i32_0 = arith.constant 0 : i32
    %c0_i32_1 = arith.constant 0 : i32
    return %c0_i32, %c0_i32_0 : i32, i32
  }
  func.func @transform_2(%arg0: i32) -> (i32, i32) {
    %c0_i32 = arith.constant 0 : i32
    %c0_i32_0 = arith.constant 0 : i32
    %c0_i32_1 = arith.constant 0 : i32
    return %c0_i32, %c0_i32_0 : i32, i32
  }
  func.func @transform_3(%arg0: i32) -> (i32, i32) {
    %c0_i32 = arith.constant 0 : i32
    %c0_i32_0 = arith.constant 0 : i32
    %c0_i32_1 = arith.constant 0 : i32
    return %c0_i32, %c0_i32_0 : i32, i32
  }
  func.func @transform_4(%arg0: i32) -> (i32, i32) {
    %c0_i32 = arith.constant 0 : i32
    %c0_i32_0 = arith.constant 0 : i32
    %c0_i32_1 = arith.constant 0 : i32
    return %c0_i32, %c0_i32_0 : i32, i32
  }
  func.func @transform_5(%arg0: i32) -> (i32, i32) {
    %c0_i32 = arith.constant 0 : i32
    %c0_i32_0 = arith.constant 0 : i32
    return %arg0, %c0_i32 : i32, i32
  }
}

</mosaic_0001>

<llo_original>
// kernel: tpu_custom_call.1
$region0: #{tpu_custom_call.1}
  #allocation0 [shape = 'u32[]', space=smem, size = 0x4, offset = 0x4, fixed_abs, tag = 'smem constant byte address 0x4 - core index']
  #allocation1 [shape = 'u32[144,128]{1,0:T(1,128)}', space=vmem, size = 0x12000, scoped, tag = 'internal scratch']
  %s0 = inlined_call_operand.hbm [shape: f32[40,128], index: 0, kind: input, shape index: {}]
  %s1 = inlined_call_operand.hbm [shape: f32[128,128], index: 1, kind: input, shape index: {}]
  %s2 = inlined_call_operand.vmem [shape: f32[1,128], index: 2, kind: input, shape index: {}]
  %s3 = inlined_call_operand.hbm [shape: f32[128,128], index: 3, kind: input, shape index: {}]
  %s4 = inlined_call_operand.vmem [shape: f32[1,128], index: 4, kind: input, shape index: {}]
  %s5 = inlined_call_operand.hbm [shape: f32[40,128], index: 5, kind: output, shape index: {}]
  %s6 = sld [smem:[#allocation0]]
  $region65: #{tpu_custom_call.1} parent=0
    _
  %s8 = ssub.s32 1, %s6
  %s9 = scalar_select 0, %s8, %s6
  $region1: #{tpu_custom_call.1} parent=0
    #allocation2 [shape = 'u8[24576]{0}', space=vmem, size = 0x6000, scoped, tag = 'input window, operand 0']
    #allocation3 [shape = 's32[2]{0}', space=sflag, size = 0x8, scoped, tag = 'scoped memory for tpu_custom_call.1']
    #allocation4 [shape = 's32[2]{0}', space=sflag, size = 0x8, scoped, tag = 'scoped memory for tpu_custom_call.1']
    #allocation5 [shape = 'u8[65536]{0}', space=vmem, size = 0x10000, scoped, tag = 'input window, operand 1, single buffered']
    #allocation6 [shape = 's32[1]{0}', space=sflag, size = 0x4, scoped, tag = 'scoped memory for tpu_custom_call.1']
    #allocation7 [shape = 'u8[65536]{0}', space=vmem, size = 0x10000, scoped, tag = 'input window, operand 3, single buffered']
    #allocation8 [shape = 'u8[24576]{0}', space=vmem, size = 0x6000, scoped, tag = 'output window, operand 0']
    %10 = vsyncpa [#allocation3], 0
    %s11 = scalar_lea.sflag [#allocation3], 1
    %12 = vsyncpa %s11, 0
    %13 = vsyncpa [#allocation6], 0
    %14 = vsyncpa [#allocation4], 0
    %s15 = scalar_lea.sflag [#allocation4], 1
    %16 = vsyncpa %s15, 0
    loop: start=0, step=1, limit=4
    $region2: #{tpu_custom_call.1} parent=1 // loop_pre_header
      _
    $region3: #{tpu_custom_call.1} parent=1 // loop_header
      %s18 = sphi 0, %s22
      %p19 = scmp.ge.s32.totalorder %s18, 4
      %s28 = sphi 0, %s30
      %s31 = sphi 0, %s28
      %s32 = sphi 0, %s31
      %s48 = sphi 0, %s32
      %s52 = sphi 0, %s52
      %s54 = sphi 0, %s52
      %s55 = sphi 0, %s54
      %s69 = sphi 0, %s55
      %s73 = sphi 0, %s73
      %s75 = sphi 0, %s73
      %s76 = sphi 0, %s75
      %s90 = sphi 0, %s76
      %s94 = sphi 0, %s94
      %s96 = sphi 0, %s94
      %s97 = sphi 0, %s96
      %s111 = sphi 0, %s97
      %s115 = sphi 0, %s115
      %s117 = sphi 0, %s115
      %s118 = sphi 0, %s117
      %s132 = sphi 0, %s118
      %s138 = sphi 0, %s140
      %s141 = sphi 0, %s138
      %s142 = sphi 0, %s141
      %s158 = sphi 0, %s142
    $region4: #{tpu_custom_call.1} parent=1 // loop_header_branch
      %21 = sbr.rel (%p19) target = $region8
    $region5: #{tpu_custom_call.1} parent=1 // loop_body
      %s23 = ssub.s32 %s18, 1
      %s24 = ssub.s32 %s18, 2
      %s25 = sadd.s32 %s18, 1
      %s26 = ssub.s32 %s18, %s25
      %p27 = scmp.eq.s32.totalorder %s26, 0
      %s29 = sadd.s32 %s28, 1
      %s30 = scalar_select %p27, %s28, %s29
      %p33 = pneg %p27
      %p34 = scmp.eq.s32.totalorder %s18, 1
      %p35 = por %p33, %p34
      %p36 = scmp.ne.s32.totalorder %s28, %s31
      %p37 = scmp.eq.s32.totalorder %s18, 0
      %p38 = por %p36, %p37
      %p39 = scmp.ne.s32.totalorder %s28, %s31
      %p40 = scmp.eq.s32.totalorder %s23, 1
      %p41 = por %p39, %p40
      %p42 = scmp.ne.s32.totalorder %s31, %s32
      %p43 = scmp.eq.s32.totalorder %s23, 0
      %p44 = por %p42, %p43
      %p45 = scmp.ne.s32.totalorder %s31, %s32
      %p46 = scmp.eq.s32.totalorder %s24, 1
      %p47 = por %p45, %p46
      %p49 = scmp.ne.s32.totalorder %s32, %s48
      %p50 = scmp.eq.s32.totalorder %s24, 0
      %p51 = por %p49, %p50
      %s53 = sadd.s32 %s52, 1
      %p56 = scmp.eq.s32.totalorder %s18, 1
      %p57 = scmp.ne.s32.totalorder %s52, %s54
      %p58 = scmp.eq.s32.totalorder %s18, 0
      %p59 = por %p57, %p58
      %p60 = scmp.ne.s32.totalorder %s52, %s54
      %p61 = scmp.eq.s32.totalorder %s23, 1
      %p62 = por %p60, %p61
      %p63 = scmp.ne.s32.totalorder %s54, %s55
      %p64 = scmp.eq.s32.totalorder %s23, 0
      %p65 = por %p63, %p64
      %p66 = scmp.ne.s32.totalorder %s54, %s55
      %p67 = scmp.eq.s32.totalorder %s24, 1
      %p68 = por %p66, %p67
      %p70 = scmp.ne.s32.totalorder %s55, %s69
      %p71 = scmp.eq.s32.totalorder %s24, 0
      %p72 = por %p70, %p71
      %s74 = sadd.s32 %s73, 1
      %p77 = scmp.eq.s32.totalorder %s18, 1
      %p78 = scmp.ne.s32.totalorder %s73, %s75
      %p79 = scmp.eq.s32.totalorder %s18, 0
      %p80 = por %p78, %p79
      %p81 = scmp.ne.s32.totalorder %s73, %s75
      %p82 = scmp.eq.s32.totalorder %s23, 1
      %p83 = por %p81, %p82
      %p84 = scmp.ne.s32.totalorder %s75, %s76
      %p85 = scmp.eq.s32.totalorder %s23, 0
      %p86 = por %p84, %p85
      %p87 = scmp.ne.s32.totalorder %s75, %s76
      %p88 = scmp.eq.s32.totalorder %s24, 1
      %p89 = por %p87, %p88
      %p91 = scmp.ne.s32.totalorder %s76, %s90
      %p92 = scmp.eq.s32.totalorder %s24, 0
      %p93 = por %p91, %p92
      %s95 = sadd.s32 %s94, 1
      %p98 = scmp.eq.s32.totalorder %s18, 1
      %p99 = scmp.ne.s32.totalorder %s94, %s96
      %p100 = scmp.eq.s32.totalorder %s18, 0
      %p101 = por %p99, %p100
      %p102 = scmp.ne.s32.totalorder %s94, %s96
      %p103 = scmp.eq.s32.totalorder %s23, 1
      %p104 = por %p102, %p103
      %p105 = scmp.ne.s32.totalorder %s96, %s97
      %p106 = scmp.eq.s32.totalorder %s23, 0
      %p107 = por %p105, %p106
      %p108 = scmp.ne.s32.totalorder %s96, %s97
      %p109 = scmp.eq.s32.totalorder %s24, 1
      %p110 = por %p108, %p109
      %p112 = scmp.ne.s32.totalorder %s97, %s111
      %p113 = scmp.eq.s32.totalorder %s24, 0
      %p114 = por %p112, %p113
      %s116 = sadd.s32 %s115, 1
      %p119 = scmp.eq.s32.totalorder %s18, 1
      %p120 = scmp.ne.s32.totalorder %s115, %s117
      %p121 = scmp.eq.s32.totalorder %s18, 0
      %p122 = por %p120, %p121
      %p123 = scmp.ne.s32.totalorder %s115, %s117
      %p124 = scmp.eq.s32.totalorder %s23, 1
      %p125 = por %p123, %p124
      %p126 = scmp.ne.s32.totalorder %s117, %s118
      %p127 = scmp.eq.s32.totalorder %s23, 0
      %p128 = por %p126, %p127
      %p129 = scmp.ne.s32.totalorder %s117, %s118
      %p130 = scmp.eq.s32.totalorder %s24, 1
      %p131 = por %p129, %p130
      %p133 = scmp.ne.s32.totalorder %s118, %s132
      %p134 = scmp.eq.s32.totalorder %s24, 0
      %p135 = por %p133, %p134
      %s136 = ssub.s32 %s18, %s25
      %p137 = scmp.eq.s32.totalorder %s136, 0
      %s139 = sadd.s32 %s138, 1
      %s140 = scalar_select %p137, %s138, %s139
      %p143 = pneg %p137
      %p144 = scmp.eq.s32.totalorder %s18, 1
      %p145 = por %p143, %p144
      %p146 = scmp.ne.s32.totalorder %s138, %s141
      %p147 = scmp.eq.s32.totalorder %s18, 0
      %p148 = por %p146, %p147
      %p149 = scmp.ne.s32.totalorder %s138, %s141
      %p150 = scmp.eq.s32.totalorder %s23, 1
      %p151 = por %p149, %p150
      %p152 = scmp.ne.s32.totalorder %s141, %s142
      %p153 = scmp.eq.s32.totalorder %s23, 0
      %p154 = por %p152, %p153
      %p155 = scmp.ne.s32.totalorder %s141, %s142
      %p156 = scmp.eq.s32.totalorder %s24, 1
      %p157 = por %p155, %p156
      %p159 = scmp.ne.s32.totalorder %s142, %s158
      %p160 = scmp.eq.s32.totalorder %s24, 0
      %p161 = por %p159, %p160
      %p162 = scmp.le.s32.totalorder 1, %s18
      %p163 = scmp.lt.s32.totalorder %s18, 3
      %p164 = pnand %p162, %p163
      %p165 = pneg %p164
      // Predicated region
      $region9: #{tpu_custom_call.1} parent=5 // pred_check
        _
      $region10: #{tpu_custom_call.1} parent=5 // pred_check_branch
        %167 = sbr.rel (%p164) target = $region12
      $region11: #{tpu_custom_call.1} parent=5 // pred_region
        %s168 = ssub.s32 %s18, 1
        // Predicated region
        $region13: #{tpu_custom_call.1} parent=11 // pred_check
          %p169 = pneg %p65
        $region14: #{tpu_custom_call.1} parent=11 // pred_check_branch
          %171 = sbr.rel (%p169) target = $region16
        $region15: #{tpu_custom_call.1} parent=11 // pred_region
          %s173 = ssub.s32 2048, 2048
          %174 = vsyncadd [#allocation6], %s173
          %s175 = sshll.u32 [#allocation5], 4
          %s176 = int_to_ptr.vmem [resolvable:$true] %s175
          %181 = dma.hbm_to_vmem [thread:$0]  %s1, 2048, %s176, [#allocation6], 128, 128, 8
        $region16: #{tpu_custom_call.1} parent=11 // pred_fallthru
          _
        // Predicated region
        $region17: #{tpu_custom_call.1} parent=11 // pred_check
          %p182 = pneg %p86
        $region18: #{tpu_custom_call.1} parent=11 // pred_check_branch
          %184 = sbr.rel (%p182) target = $region20
        $region19: #{tpu_custom_call.1} parent=11 // pred_region
          _
        $region20: #{tpu_custom_call.1} parent=11 // pred_fallthru
          _
        // Predicated region
        $region21: #{tpu_custom_call.1} parent=11 // pred_check
          %p185 = pneg %p107
        $region22: #{tpu_custom_call.1} parent=11 // pred_check_branch
          %187 = sbr.rel (%p185) target = $region24
        $region23: #{tpu_custom_call.1} parent=11 // pred_region
          %s189 = ssub.s32 2048, 2048
          %190 = vsyncadd [#allocation6], %s189
          %s191 = sshll.u32 [#allocation7], 4
          %s192 = int_to_ptr.vmem [resolvable:$true] %s191
          %197 = dma.hbm_to_vmem [thread:$0]  %s3, 2048, %s192, [#allocation6], 128, 128, 8
        $region24: #{tpu_custom_call.1} parent=11 // pred_fallthru
          _
        // Predicated region
        $region25: #{tpu_custom_call.1} parent=11 // pred_check
          %p198 = pneg %p128
        $region26: #{tpu_custom_call.1} parent=11 // pred_check_branch
          %200 = sbr.rel (%p198) target = $region28
        $region27: #{tpu_custom_call.1} parent=11 // pred_region
          _
        $region28: #{tpu_custom_call.1} parent=11 // pred_fallthru
          _
      $region12: #{tpu_custom_call.1} parent=5 // pred_fallthru
        _
      %p201 = scmp.lt.s32.totalorder %s18, 2
      // Predicated region
      $region29: #{tpu_custom_call.1} parent=5 // pred_check
        %p202 = pneg %p201
      $region30: #{tpu_custom_call.1} parent=5 // pred_check_branch
        %204 = sbr.rel (%p202) target = $region32
      $region31: #{tpu_custom_call.1} parent=5 // pred_region
        // Predicated region
        $region33: #{tpu_custom_call.1} parent=31 // pred_check
          %p205 = pneg %p38
        $region34: #{tpu_custom_call.1} parent=31 // pred_check_branch
          %207 = sbr.rel (%p205) target = $region36
        $region35: #{tpu_custom_call.1} parent=31 // pred_region
          %s208 = sand.u32 %s28, 1
          %s209 = scalar_lea.sflag [#allocation3], %s208
          %s210 = sand.u32 %s28, 1
          %s211 = smul.addr %s210, 24
          %s212 = scalar_lea.vmem [#allocation2], %s211
          %s213 = smul.u32 3, %s18
          %s214 = ssub.s32 5, %s213
          %p215 = scmp.lt.s32.totalorder %s214, 3
          %s216 = scalar_select %p215, %s214, 3
          %s217 = smul.u32 128, %s216
          %s219 = ssub.s32 384, %s217
          %220 = vsyncadd %s209, %s219
          %p221 = scmp.ne.s32.totalorder 0, %s217
          %s222 = smul.addr %s213, 128
          %s223 = scalar_lea.hbm %s0, %s222
          %s224 = smul.u32 8, %s216
          %s225 = sshll.u32 %s212, 4
          %s226 = int_to_ptr.vmem [resolvable:$true] %s225
          %s227 = sshll.u32 %s224, 4
          %231 = dma.hbm_to_vmem [thread:$0]  (%p221), %s223, %s227, %s226, %s209, 128, 128, 8
        $region36: #{tpu_custom_call.1} parent=31 // pred_fallthru
          _
      $region32: #{tpu_custom_call.1} parent=5 // pred_fallthru
        _
      %p232 = scmp.le.s32.totalorder 1, %s18
      %p233 = scmp.lt.s32.totalorder %s18, 3
      %p234 = pnand %p232, %p233
      %p235 = pneg %p234
      // Predicated region
      $region37: #{tpu_custom_call.1} parent=5 // pred_check
        _
      $region38: #{tpu_custom_call.1} parent=5 // pred_check_branch
        %237 = sbr.rel (%p234) target = $region40
      $region39: #{tpu_custom_call.1} parent=5 // pred_region
        %s238 = ssub.s32 %s18, 1
        %s239 = sand.u32 %s31, 1
        %s240 = scalar_lea.sflag [#allocation3], %s239
        %s241 = sand.u32 %s31, 1
        %s242 = smul.addr %s241, 24
        %s243 = scalar_lea.vmem [#allocation2], %s242
        // Predicated region
        $region41: #{tpu_custom_call.1} parent=39 // pred_check
          %p244 = pneg %p44
        $region42: #{tpu_custom_call.1} parent=39 // pred_check_branch
          %246 = sbr.rel (%p244) target = $region44
        $region43: #{tpu_custom_call.1} parent=39 // pred_region
          %247 = dma.done %s240, 384
        $region44: #{tpu_custom_call.1} parent=39 // pred_fallthru
          _
        // Predicated region
        $region45: #{tpu_custom_call.1} parent=39 // pred_check
          %p248 = pneg %p65
        $region46: #{tpu_custom_call.1} parent=39 // pred_check_branch
          %250 = sbr.rel (%p248) target = $region48
        $region47: #{tpu_custom_call.1} parent=39 // pred_region
          %251 = dma.done [#allocation6], 2048
        $region48: #{tpu_custom_call.1} parent=39 // pred_fallthru
          _
        // Predicated region
        $region49: #{tpu_custom_call.1} parent=39 // pred_check
          %p252 = pneg %p107
        $region50: #{tpu_custom_call.1} parent=39 // pred_check_branch
          %254 = sbr.rel (%p252) target = $region52
        $region51: #{tpu_custom_call.1} parent=39 // pred_region
          %255 = dma.done [#allocation6], 2048
        $region52: #{tpu_custom_call.1} parent=39 // pred_fallthru
          _
        %s256 = sand.u32 %s31, 1
        %s257 = scalar_lea.sflag [#allocation3], %s256
        %s258 = sand.u32 %s31, 1
        %s259 = smul.addr %s258, 24
        %s260 = scalar_lea.vmem [#allocation2], %s259
        %p261 = pneg %p44
        %p262 = pneg %p41
        %p263 = pneg %p65
        %p264 = pneg %p62
        %p265 = pneg %p86
        %p266 = pneg %p83
        %p267 = pneg %p107
        %p268 = pneg %p104
        %p269 = pneg %p128
        %p270 = pneg %p125
        %p271 = pneg %p154
        %p272 = pneg %p151
        %s273 = sand.u32 %s141, 1
        %s274 = scalar_lea.sflag [#allocation4], %s273
        %s275 = sand.u32 %s141, 1
        %s276 = smul.addr %s275, 24
        %s277 = scalar_lea.vmem [#allocation8], %s276
        %s278 = smul.u32 3, %s23
        %s279 = ssub.s32 5, %s278
        %p280 = scmp.lt.s32.totalorder %s279, 3
        %s281 = scalar_select %p280, %s279, 3
        %s282 = smul.u32 128, %s281
        %s283 = smul.u32 3, %s23
        %s284 = ssub.s32 5, %s283
        %p285 = scmp.lt.s32.totalorder %s284, 3
        %s286 = scalar_select %p285, %s284, 3
        %s287 = smul.u32 128, %s286
        %v288 = vld [vmem:[%s243] sm:$0xff]
        %v289 = vld [vmem:[%s243 + $0x8] sm:$0xff]
        %v290 = vld [vmem:[%s243 + $0x10] sm:$0xff]
        %v291 = vld [vmem:[#allocation5] sm:$0xff]
        %v292 = vld [vmem:[#allocation5 + $0x8] sm:$0xff]
        %v293 = vld [vmem:[#allocation5 + $0x10] sm:$0xff]
        %v294 = vld [vmem:[#allocation5 + $0x18] sm:$0xff]
        %v295 = vld [vmem:[#allocation5 + $0x20] sm:$0xff]
        %v296 = vld [vmem:[#allocation5 + $0x28] sm:$0xff]
        %v297 = vld [vmem:[#allocation5 + $0x30] sm:$0xff]
        %v298 = vld [vmem:[#allocation5 + $0x38] sm:$0xff]
        %v299 = vld [vmem:[#allocation5 + $0x40] sm:$0xff]
        %v300 = vld [vmem:[#allocation5 + $0x48] sm:$0xff]
        %v301 = vld [vmem:[#allocation5 + $0x50] sm:$0xff]
        %v302 = vld [vmem:[#allocation5 + $0x58] sm:$0xff]
        %v303 = vld [vmem:[#allocation5 + $0x60] sm:$0xff]
        %v304 = vld [vmem:[#allocation5 + $0x68] sm:$0xff]
        %v305 = vld [vmem:[#allocation5 + $0x70] sm:$0xff]
        %v306 = vld [vmem:[#allocation5 + $0x78] sm:$0xff]
        %v307 = vld [vmem:[%s2] sm:$0x1]
        %v309 = vlaneseq
        %v310 = vshrl.u32 %v309, 7
        %v311 = vsub.s32 0, %v310
        %v312 = vrot.slane %v307, %v311
        %314 = vmatprep.subr.mxu0 0.0
        %315 = vmatpush1.msra.mxu0 %v291
        %316 = vmatprep.subr.mxu0 0.0
        %317 = vmatpush1.msra.mxu0 %v292
        %318 = vmatprep.subr.mxu0 0.0
        %319 = vmatpush1.msra.mxu0 %v293
        %320 = vmatprep.subr.mxu0 0.0
        %321 = vmatpush1.msra.mxu0 %v294
        %322 = vmatprep.subr.mxu0 0.0
        %323 = vmatpush1.msra.mxu0 %v295
        %324 = vmatprep.subr.mxu0 0.0
        %325 = vmatpush1.msra.mxu0 %v296
        %326 = vmatprep.subr.mxu0 0.0
        %327 = vmatpush1.msra.mxu0 %v297
        %328 = vmatprep.subr.mxu0 0.0
        %329 = vmatpush1.msra.mxu0 %v298
        %330 = vmatprep.subr.mxu0 0.0
        %331 = vmatpush1.msra.mxu0 %v299
        %332 = vmatprep.subr.mxu0 0.0
        %333 = vmatpush1.msra.mxu0 %v300
        %334 = vmatprep.subr.mxu0 0.0
        %335 = vmatpush1.msra.mxu0 %v301
        %336 = vmatprep.subr.mxu0 0.0
        %337 = vmatpush1.msra.mxu0 %v302
        %338 = vmatprep.subr.mxu0 0.0
        %339 = vmatpush1.msra.mxu0 %v303
        %340 = vmatprep.subr.mxu0 0.0
        %341 = vmatpush1.msra.mxu0 %v304
        %342 = vmatprep.subr.mxu0 0.0
        %343 = vmatpush1.msra.mxu0 %v305
        %344 = vmatprep.subr.mxu0 0.0
        %345 = vmatpush1.msra.mxu0 %v306
        %346 = vmatprep.subr.mxu0 0.0
        %347 = vmatpush1.msra.mxu0 0.0
        %348 = vmatprep.subr.mxu0 0.0
        %349 = vmatpush1.msra.mxu0 0.0
        %350 = vmatprep.subr.mxu0 0.0
        %351 = vmatpush1.msra.mxu0 0.0
        %352 = vmatprep.subr.mxu0 0.0
        %353 = vmatpush1.msra.mxu0 0.0
        %354 = vmatprep.subr.mxu0 0.0
        %355 = vmatpush1.msra.mxu0 0.0
        %356 = vmatprep.subr.mxu0 0.0
        %357 = vmatpush1.msra.mxu0 0.0
        %358 = vmatprep.subr.mxu0 0.0
        %359 = vmatpush1.msra.mxu0 0.0
        %360 = vmatprep.subr.mxu0 0.0
        %361 = vmatpush1.msra.mxu0 0.0
        %362 = vmatprep.subr.mxu0 0.0
        %363 = vmatpush1.msra.mxu0 0.0
        %364 = vmatprep.subr.mxu0 0.0
        %365 = vmatpush1.msra.mxu0 0.0
        %366 = vmatprep.subr.mxu0 0.0
        %367 = vmatpush1.msra.mxu0 0.0
        %368 = vmatprep.subr.mxu0 0.0
        %369 = vmatpush1.msra.mxu0 0.0
        %370 = vmatprep.subr.mxu0 0.0
        %371 = vmatpush1.msra.mxu0 0.0
        %372 = vmatprep.subr.mxu0 0.0
        %373 = vmatpush1.msra.mxu0 0.0
        %374 = vmatprep.subr.mxu0 0.0
        %375 = vmatpush1.msra.mxu0 0.0
        %376 = vmatprep.subr.mxu0 0.0
        %377 = vmatpush1.msra.mxu0 0.0
        %378 = vmatprep.mubr.f32.mxu0 0.0
        %379 = vmatmul.mubr.f32.gmra.mrb[0].mxu0 %v288
        %v380 = vpop.f32.mrb[0].mxu0
        %v381 = vadd.f32 %v312, %v380
        %v382 = vpop.f32.mrb[0].mxu0
        %383 = vmatprep.mubr.f32.mxu0 0.0
        %384 = vmatmul.mubr.f32.gmra.mrb[0].mxu0 %v289
        %v385 = vpop.f32.mrb[0].mxu0
        %v386 = vadd.f32 %v312, %v385
        %v387 = vpop.f32.mrb[0].mxu0
        %388 = vmatprep.mubr.f32.mxu0 0.0
        %389 = vmatmul.mubr.f32.gmra.mrb[0].mxu0 %v290
        %v390 = vpop.f32.mrb[0].mxu0
        %v391 = vadd.f32 %v312, %v390
        %v392 = vpop.f32.mrb[0].mxu0
        %393 = vdwg.mxu0
        %v394 = vmin.f32 %v381, 20.0
        %v395 = vmin.f32 %v386, 20.0
        %v396 = vmin.f32 %v391, 20.0
        %v397 = vmul.f32 %v394, 1.442695
        %v398 = vpow.pop %v397
        %v399 = vmul.f32 %v395, 1.442695
        %v400 = vpow.pop %v399
        %v401 = vmul.f32 %v396, 1.442695
        %v402 = vpow.pop %v401
        %v403 = vadd.f32 %v398, 2.0
        %v404 = vadd.f32 %v400, 2.0
        %v405 = vadd.f32 %v402, 2.0
        %v406 = vmul.f32 %v398, %v403
        %v407 = vmul.f32 %v400, %v404
        %v408 = vmul.f32 %v402, %v405
        %v409 = vadd.f32 %v406, 2.0
        %v410 = vadd.f32 %v407, 2.0
        %v411 = vadd.f32 %v408, 2.0
        %v412 = vrcp.pop %v409
        %v413 = vrcp.pop %v410
        %v414 = vrcp.pop %v411
        %v415 = vmul.f32 %v409, %v412
        %v416 = vmul.f32 %v410, %v413
        %v417 = vmul.f32 %v411, %v414
        %v418 = vsub.f32 2.0, %v415
        %v419 = vsub.f32 2.0, %v416
        %v420 = vsub.f32 2.0, %v417
        %v421 = vmul.f32 %v412, %v418
        %v422 = vmul.f32 %v413, %v419
        %v423 = vmul.f32 %v414, %v420
        %v424 = vmul.f32 %v381, %v406
        %v425 = vmul.f32 %v386, %v407
        %v426 = vmul.f32 %v391, %v408
        %v427 = vmul.f32 %v424, %v421
        %v428 = vmul.f32 %v425, %v422
        %v429 = vmul.f32 %v426, %v423
        %v430 = vld [vmem:[#allocation7] sm:$0xff]
        %v431 = vld [vmem:[#allocation7 + $0x8] sm:$0xff]
        %v432 = vld [vmem:[#allocation7 + $0x10] sm:$0xff]
        %v433 = vld [vmem:[#allocation7 + $0x18] sm:$0xff]
        %v434 = vld [vmem:[#allocation7 + $0x20] sm:$0xff]
        %v435 = vld [vmem:[#allocation7 + $0x28] sm:$0xff]
        %v436 = vld [vmem:[#allocation7 + $0x30] sm:$0xff]
        %v437 = vld [vmem:[#allocation7 + $0x38] sm:$0xff]
        %v438 = vld [vmem:[#allocation7 + $0x40] sm:$0xff]
        %v439 = vld [vmem:[#allocation7 + $0x48] sm:$0xff]
        %v440 = vld [vmem:[#allocation7 + $0x50] sm:$0xff]
        %v441 = vld [vmem:[#allocation7 + $0x58] sm:$0xff]
        %v442 = vld [vmem:[#allocation7 + $0x60] sm:$0xff]
        %v443 = vld [vmem:[#allocation7 + $0x68] sm:$0xff]
        %v444 = vld [vmem:[#allocation7 + $0x70] sm:$0xff]
        %v445 = vld [vmem:[#allocation7 + $0x78] sm:$0xff]
        %v446 = vld [vmem:[%s4] sm:$0x1]
        %v448 = vlaneseq
        %v449 = vshrl.u32 %v448, 7
        %v450 = vsub.s32 0, %v449
        %v451 = vrot.slane %v446, %v450
        %453 = vmatprep.subr.mxu0 0.0
        %454 = vmatpush1.msra.mxu0 %v430
        %455 = vmatprep.subr.mxu0 0.0
        %456 = vmatpush1.msra.mxu0 %v431
        %457 = vmatprep.subr.mxu0 0.0
        %458 = vmatpush1.msra.mxu0 %v432
        %459 = vmatprep.subr.mxu0 0.0
        %460 = vmatpush1.msra.mxu0 %v433
        %461 = vmatprep.subr.mxu0 0.0
        %462 = vmatpush1.msra.mxu0 %v434
        %463 = vmatprep.subr.mxu0 0.0
        %464 = vmatpush1.msra.mxu0 %v435
        %465 = vmatprep.subr.mxu0 0.0
        %466 = vmatpush1.msra.mxu0 %v436
        %467 = vmatprep.subr.mxu0 0.0
        %468 = vmatpush1.msra.mxu0 %v437
        %469 = vmatprep.subr.mxu0 0.0
        %470 = vmatpush1.msra.mxu0 %v438
        %471 = vmatprep.subr.mxu0 0.0
        %472 = vmatpush1.msra.mxu0 %v439
        %473 = vmatprep.subr.mxu0 0.0
        %474 = vmatpush1.msra.mxu0 %v440
        %475 = vmatprep.subr.mxu0 0.0
        %476 = vmatpush1.msra.mxu0 %v441
        %477 = vmatprep.subr.mxu0 0.0
        %478 = vmatpush1.msra.mxu0 %v442
        %479 = vmatprep.subr.mxu0 0.0
        %480 = vmatpush1.msra.mxu0 %v443
        %481 = vmatprep.subr.mxu0 0.0
        %482 = vmatpush1.msra.mxu0 %v444
        %483 = vmatprep.subr.mxu0 0.0
        %484 = vmatpush1.msra.mxu0 %v445
        %485 = vmatprep.subr.mxu0 0.0
        %486 = vmatpush1.msra.mxu0 0.0
        %487 = vmatprep.subr.mxu0 0.0
        %488 = vmatpush1.msra.mxu0 0.0
        %489 = vmatprep.subr.mxu0 0.0
        %490 = vmatpush1.msra.mxu0 0.0
        %491 = vmatprep.subr.mxu0 0.0
        %492 = vmatpush1.msra.mxu0 0.0
        %493 = vmatprep.subr.mxu0 0.0
        %494 = vmatpush1.msra.mxu0 0.0
        %495 = vmatprep.subr.mxu0 0.0
        %496 = vmatpush1.msra.mxu0 0.0
        %497 = vmatprep.subr.mxu0 0.0
        %498 = vmatpush1.msra.mxu0 0.0
        %499 = vmatprep.subr.mxu0 0.0
        %500 = vmatpush1.msra.mxu0 0.0
        %501 = vmatprep.subr.mxu0 0.0
        %502 = vmatpush1.msra.mxu0 0.0
        %503 = vmatprep.subr.mxu0 0.0
        %504 = vmatpush1.msra.mxu0 0.0
        %505 = vmatprep.subr.mxu0 0.0
        %506 = vmatpush1.msra.mxu0 0.0
        %507 = vmatprep.subr.mxu0 0.0
        %508 = vmatpush1.msra.mxu0 0.0
        %509 = vmatprep.subr.mxu0 0.0
        %510 = vmatpush1.msra.mxu0 0.0
        %511 = vmatprep.subr.mxu0 0.0
        %512 = vmatpush1.msra.mxu0 0.0
        %513 = vmatprep.subr.mxu0 0.0
        %514 = vmatpush1.msra.mxu0 0.0
        %515 = vmatprep.subr.mxu0 0.0
        %516 = vmatpush1.msra.mxu0 0.0
        %517 = vmatprep.mubr.f32.mxu0 0.0
        %518 = vmatmul.mubr.f32.gmra.mrb[0].mxu0 %v427
        %v519 = vpop.f32.mrb[0].mxu0
        %v520 = vadd.f32 %v451, %v519
        %v521 = vpop.f32.mrb[0].mxu0
        %522 = vmatprep.mubr.f32.mxu0 0.0
        %523 = vmatmul.mubr.f32.gmra.mrb[0].mxu0 %v428
        %v524 = vpop.f32.mrb[0].mxu0
        %v525 = vadd.f32 %v451, %v524
        %v526 = vpop.f32.mrb[0].mxu0
        %527 = vmatprep.mubr.f32.mxu0 0.0
        %528 = vmatmul.mubr.f32.gmra.mrb[0].mxu0 %v429
        %v529 = vpop.f32.mrb[0].mxu0
        %v530 = vadd.f32 %v451, %v529
        %v531 = vpop.f32.mrb[0].mxu0
        %532 = vdwg.mxu0
        %v533 = vadd.f32 %v288, %v520
        %v534 = vadd.f32 %v289, %v525
        %v535 = vadd.f32 %v290, %v530
        %536 = vst [vmem:[%s277] sm:$0xff] %v533
        %537 = vst [vmem:[%s277 + $0x8] sm:$0xff] %v534
        %538 = vst [vmem:[%s277 + $0x10] sm:$0xff] %v535
        %s539 = sand.u32 %s141, 1
        %s540 = scalar_lea.sflag [#allocation4], %s539
        %s541 = sand.u32 %s141, 1
        %s542 = smul.addr %s541, 24
        %s543 = scalar_lea.vmem [#allocation8], %s542
        // Predicated region
        $region53: #{tpu_custom_call.1} parent=39 // pred_check
          %p544 = pneg %p151
        $region54: #{tpu_custom_call.1} parent=39 // pred_check_branch
          %546 = sbr.rel (%p544) target = $region56
        $region55: #{tpu_custom_call.1} parent=39 // pred_region
          %s547 = smul.u32 3, %s23
          %s548 = ssub.s32 5, %s547
          %p549 = scmp.lt.s32.totalorder %s548, 3
          %s550 = scalar_select %p549, %s548, 3
          %s551 = smul.u32 128, %s550
          %s553 = ssub.s32 384, %s551
          %554 = vsyncadd %s540, %s553
          %p555 = scmp.ne.s32.totalorder 0, %s551
          %s556 = smul.addr %s547, 128
          %s557 = scalar_lea.hbm %s5, %s556
          %s558 = smul.u32 8, %s550
          %s559 = sshll.u32 %s543, 4
          %s560 = int_to_ptr.vmem [resolvable:$true] %s559
          %s561 = sshll.u32 %s558, 4
          %565 = dma.vmem_to_hbm [thread:$0]  (%p555), %s560, %s561, %s557, %s540, 128, 128, 8
        $region56: #{tpu_custom_call.1} parent=39 // pred_fallthru
          _
      $region40: #{tpu_custom_call.1} parent=5 // pred_fallthru
        _
      %p566 = scmp.le.s32.totalorder 2, %s18
      // Predicated region
      $region57: #{tpu_custom_call.1} parent=5 // pred_check
        %p567 = pneg %p566
      $region58: #{tpu_custom_call.1} parent=5 // pred_check_branch
        %569 = sbr.rel (%p567) target = $region60
      $region59: #{tpu_custom_call.1} parent=5 // pred_region
        %s570 = ssub.s32 %s18, 2
        // Predicated region
        $region61: #{tpu_custom_call.1} parent=59 // pred_check
          %p571 = pneg %p157
        $region62: #{tpu_custom_call.1} parent=59 // pred_check_branch
          %573 = sbr.rel (%p571) target = $region64
        $region63: #{tpu_custom_call.1} parent=59 // pred_region
          %s574 = sand.u32 %s142, 1
          %s575 = scalar_lea.sflag [#allocation4], %s574
          %s576 = sand.u32 %s142, 1
          %s577 = smul.addr %s576, 24
          %s578 = scalar_lea.vmem [#allocation8], %s577
          %579 = dma.done %s575, 384
        $region64: #{tpu_custom_call.1} parent=59 // pred_fallthru
          _
      $region60: #{tpu_custom_call.1} parent=5 // pred_fallthru
        _
    $region6: #{tpu_custom_call.1} parent=1 // loop_footer
      %s22 = sadd.s32 1, %s18
    $region7: #{tpu_custom_call.1} parent=1 // loop_footer_branch
      %17 = sbr.rel target = $region3
    $region8: #{tpu_custom_call.1} parent=1 // loop_exit
      _
    %580 = vsyncpa [#allocation3], 1
    %s581 = scalar_lea.sflag [#allocation3], 1
    %582 = vsyncpa %s581, 1
    %583 = vsyncpa [#allocation6], 1
    %584 = vsyncpa [#allocation4], 1
    %s585 = scalar_lea.sflag [#allocation4], 1
    %586 = vsyncpa %s585, 1

// kernel: tpu_custom_call.1
$region0: #{tpu_custom_call.1}
  #allocation0 [shape = 'u32[]', space=smem, size = 0x4, offset = 0x4, fixed_abs, tag = 'smem constant byte address 0x4 - core index']
  #allocation1 [shape = 'u32[144,128]{1,0:T(1,128)}', space=vmem, size = 0x12000, scoped, tag = 'internal scratch']
  %s0 = inlined_call_operand.hbm [shape: f32[40,128], index: 0, kind: input, shape index: {}]
  %s1 = inlined_call_operand.hbm [shape: f32[128,128], index: 1, kind: input, shape index: {}]
  %s2 = inlined_call_operand.vmem [shape: f32[1,128], index: 2, kind: input, shape index: {}]
  %s3 = inlined_call_operand.hbm [shape: f32[128,128], index: 3, kind: input, shape index: {}]
  %s4 = inlined_call_operand.vmem [shape: f32[1,128], index: 4, kind: input, shape index: {}]
  %s5 = inlined_call_operand.hbm [shape: f32[40,128], index: 5, kind: output, shape index: {}]
  %s6 = sld [smem:[#allocation0]]
  $region65: #{tpu_custom_call.1} parent=0
    _
  %s8 = ssub.s32 1, %s6
  %s9 = scalar_select 0, %s8, %s6
  $region1: #{tpu_custom_call.1} parent=0
    #allocation2 [shape = 'u8[24576]{0}', space=vmem, size = 0x6000, scoped, tag = 'input window, operand 0']
    #allocation3 [shape = 's32[2]{0}', space=sflag, size = 0x8, scoped, tag = 'scoped memory for tpu_custom_call.1']
    #allocation4 [shape = 's32[2]{0}', space=sflag, size = 0x8, scoped, tag = 'scoped memory for tpu_custom_call.1']
    #allocation5 [shape = 'u8[65536]{0}', space=vmem, size = 0x10000, scoped, tag = 'input window, operand 1, single buffered']
    #allocation6 [shape = 's32[1]{0}', space=sflag, size = 0x4, scoped, tag = 'scoped memory for tpu_custom_call.1']
    #allocation7 [shape = 'u8[65536]{0}', space=vmem, size = 0x10000, scoped, tag = 'input window, operand 3, single buffered']
    #allocation8 [shape = 'u8[24576]{0}', space=vmem, size = 0x6000, scoped, tag = 'output window, operand 0']
    %10 = vsyncpa [#allocation3], 0
    %s11 = scalar_lea.sflag [#allocation3], 1
    %12 = vsyncpa %s11, 0
    %13 = vsyncpa [#allocation6], 0
    %14 = vsyncpa [#allocation4], 0
    %s15 = scalar_lea.sflag [#allocation4], 1
    %16 = vsyncpa %s15, 0
    loop: start=0, step=1, limit=4
    $region2: #{tpu_custom_call.1} parent=1 // loop_pre_header
      _
    $region3: #{tpu_custom_call.1} parent=1 // loop_header
      %s18 = sphi 0, %s22
      %p19 = scmp.ge.s32.totalorder %s18, 4
      %s28 = sphi 0, %s30
      %s31 = sphi 0, %s28
      %s32 = sphi 0, %s31
      %s48 = sphi 0, %s32
      %s52 = sphi 0, %s52
      %s54 = sphi 0, %s52
      %s55 = sphi 0, %s54
      %s69 = sphi 0, %s55
      %s73 = sphi 0, %s73
      %s75 = sphi 0, %s73
      %s76 = sphi 0, %s75
      %s90 = sphi 0, %s76
      %s94 = sphi 0, %s94
      %s96 = sphi 0, %s94
      %s97 = sphi 0, %s96
      %s111 = sphi 0, %s97
      %s115 = sphi 0, %s115
      %s117 = sphi 0, %s115
      %s118 = sphi 0, %s117
      %s132 = sphi 0, %s118
      %s138 = sphi 0, %s140
      %s141 = sphi 0, %s138
      %s142 = sphi 0, %s141
      %s158 = sphi 0, %s142
    $region4: #{tpu_custom_call.1} parent=1 // loop_header_branch
      %21 = sbr.rel (%p19) target = $region8
    $region5: #{tpu_custom_call.1} parent=1 // loop_body
      %s23 = ssub.s32 %s18, 1
      %s24 = ssub.s32 %s18, 2
      %s25 = sadd.s32 %s18, 1
      %s26 = ssub.s32 %s18, %s25
      %p27 = scmp.eq.s32.totalorder %s26, 0
      %s29 = sadd.s32 %s28, 1
      %s30 = scalar_select %p27, %s28, %s29
      %p33 = pneg %p27
      %p34 = scmp.eq.s32.totalorder %s18, 1
      %p35 = por %p33, %p34
      %p36 = scmp.ne.s32.totalorder %s28, %s31
      %p37 = scmp.eq.s32.totalorder %s18, 0
      %p38 = por %p36, %p37
      %p39 = scmp.ne.s32.totalorder %s28, %s31
      %p40 = scmp.eq.s32.totalorder %s23, 1
      %p41 = por %p39, %p40
      %p42 = scmp.ne.s32.totalorder %s31, %s32
      %p43 = scmp.eq.s32.totalorder %s23, 0
      %p44 = por %p42, %p43
      %p45 = scmp.ne.s32.totalorder %s31, %s32
      %p46 = scmp.eq.s32.totalorder %s24, 1
      %p47 = por %p45, %p46
      %p49 = scmp.ne.s32.totalorder %s32, %s48
      %p50 = scmp.eq.s32.totalorder %s24, 0
      %p51 = por %p49, %p50
      %s53 = sadd.s32 %s52, 1
      %p56 = scmp.eq.s32.totalorder %s18, 1
      %p57 = scmp.ne.s32.totalorder %s52, %s54
      %p58 = scmp.eq.s32.totalorder %s18, 0
      %p59 = por %p57, %p58
      %p60 = scmp.ne.s32.totalorder %s52, %s54
      %p61 = scmp.eq.s32.totalorder %s23, 1
      %p62 = por %p60, %p61
      %p63 = scmp.ne.s32.totalorder %s54, %s55
      %p64 = scmp.eq.s32.totalorder %s23, 0
      %p65 = por %p63, %p64
      %p66 = scmp.ne.s32.totalorder %s54, %s55
      %p67 = scmp.eq.s32.totalorder %s24, 1
      %p68 = por %p66, %p67
      %p70 = scmp.ne.s32.totalorder %s55, %s69
      %p71 = scmp.eq.s32.totalorder %s24, 0
      %p72 = por %p70, %p71
      %s74 = sadd.s32 %s73, 1
      %p77 = scmp.eq.s32.totalorder %s18, 1
      %p78 = scmp.ne.s32.totalorder %s73, %s75
      %p79 = scmp.eq.s32.totalorder %s18, 0
      %p80 = por %p78, %p79
      %p81 = scmp.ne.s32.totalorder %s73, %s75
      %p82 = scmp.eq.s32.totalorder %s23, 1
      %p83 = por %p81, %p82
      %p84 = scmp.ne.s32.totalorder %s75, %s76
      %p85 = scmp.eq.s32.totalorder %s23, 0
      %p86 = por %p84, %p85
      %p87 = scmp.ne.s32.totalorder %s75, %s76
      %p88 = scmp.eq.s32.totalorder %s24, 1
      %p89 = por %p87, %p88
      %p91 = scmp.ne.s32.totalorder %s76, %s90
      %p92 = scmp.eq.s32.totalorder %s24, 0
      %p93 = por %p91, %p92
      %s95 = sadd.s32 %s94, 1
      %p98 = scmp.eq.s32.totalorder %s18, 1
      %p99 = scmp.ne.s32.totalorder %s94, %s96
      %p100 = scmp.eq.s32.totalorder %s18, 0
      %p101 = por %p99, %p100
      %p102 = scmp.ne.s32.totalorder %s94, %s96
      %p103 = scmp.eq.s32.totalorder %s23, 1
      %p104 = por %p102, %p103
      %p105 = scmp.ne.s32.totalorder %s96, %s97
      %p106 = scmp.eq.s32.totalorder %s23, 0
      %p107 = por %p105, %p106
      %p108 = scmp.ne.s32.totalorder %s96, %s97
      %p109 = scmp.eq.s32.totalorder %s24, 1
      %p110 = por %p108, %p109
      %p112 = scmp.ne.s32.totalorder %s97, %s111
      %p113 = scmp.eq.s32.totalorder %s24, 0
      %p114 = por %p112, %p113
      %s116 = sadd.s32 %s115, 1
      %p119 = scmp.eq.s32.totalorder %s18, 1
      %p120 = scmp.ne.s32.totalorder %s115, %s117
      %p121 = scmp.eq.s32.totalorder %s18, 0
      %p122 = por %p120, %p121
      %p123 = scmp.ne.s32.totalorder %s115, %s117
      %p124 = scmp.eq.s32.totalorder %s23, 1
      %p125 = por %p123, %p124
      %p126 = scmp.ne.s32.totalorder %s117, %s118
      %p127 = scmp.eq.s32.totalorder %s23, 0
      %p128 = por %p126, %p127
      %p129 = scmp.ne.s32.totalorder %s117, %s118
      %p130 = scmp.eq.s32.totalorder %s24, 1
      %p131 = por %p129, %p130
      %p133 = scmp.ne.s32.totalorder %s118, %s132
      %p134 = scmp.eq.s32.totalorder %s24, 0
      %p135 = por %p133, %p134
      %s136 = ssub.s32 %s18, %s25
      %p137 = scmp.eq.s32.totalorder %s136, 0
      %s139 = sadd.s32 %s138, 1
      %s140 = scalar_select %p137, %s138, %s139
      %p143 = pneg %p137
      %p144 = scmp.eq.s32.totalorder %s18, 1
      %p145 = por %p143, %p144
      %p146 = scmp.ne.s32.totalorder %s138, %s141
      %p147 = scmp.eq.s32.totalorder %s18, 0
      %p148 = por %p146, %p147
      %p149 = scmp.ne.s32.totalorder %s138, %s141
      %p150 = scmp.eq.s32.totalorder %s23, 1
      %p151 = por %p149, %p150
      %p152 = scmp.ne.s32.totalorder %s141, %s142
      %p153 = scmp.eq.s32.totalorder %s23, 0
      %p154 = por %p152, %p153
      %p155 = scmp.ne.s32.totalorder %s141, %s142
      %p156 = scmp.eq.s32.totalorder %s24, 1
      %p157 = por %p155, %p156
      %p159 = scmp.ne.s32.totalorder %s142, %s158
      %p160 = scmp.eq.s32.totalorder %s24, 0
      %p161 = por %p159, %p160
      %p162 = scmp.le.s32.totalorder 1, %s18
      %p163 = scmp.lt.s32.totalorder %s18, 3
      %p164 = pnand %p162, %p163
      %p165 = pneg %p164
      // Predicated region
      $region9: #{tpu_custom_call.1} parent=5 // pred_check
        _
      $region10: #{tpu_custom_call.1} parent=5 // pred_check_branch
        %167 = sbr.rel (%p164) target = $region12
      $region11: #{tpu_custom_call.1} parent=5 // pred_region
        %s168 = ssub.s32 %s18, 1
        // Predicated region
        $region13: #{tpu_custom_call.1} parent=11 // pred_check
          %p169 = pneg %p65
        $region14: #{tpu_custom_call.1} parent=11 // pred_check_branch
          %171 = sbr.rel (%p169) target = $region16
        $region15: #{tpu_custom_call.1} parent=11 // pred_region
          %s173 = ssub.s32 2048, 2048
          %174 = vsyncadd [#allocation6], %s173
          %s175 = sshll.u32 [#allocation5], 4
          %s176 = int_to_ptr.vmem [resolvable:$true] %s175
          %181 = dma.hbm_to_vmem [thread:$0]  %s1, 2048, %s176, [#allocation6], 128, 128, 8
        $region16: #{tpu_custom_call.1} parent=11 // pred_fallthru
          _
        // Predicated region
        $region17: #{tpu_custom_call.1} parent=11 // pred_check
          %p182 = pneg %p86
        $region18: #{tpu_custom_call.1} parent=11 // pred_check_branch
          %184 = sbr.rel (%p182) target = $region20
        $region19: #{tpu_custom_call.1} parent=11 // pred_region
          _
        $region20: #{tpu_custom_call.1} parent=11 // pred_fallthru
          _
        // Predicated region
        $region21: #{tpu_custom_call.1} parent=11 // pred_check
          %p185 = pneg %p107
        $region22: #{tpu_custom_call.1} parent=11 // pred_check_branch
          %187 = sbr.rel (%p185) target = $region24
        $region23: #{tpu_custom_call.1} parent=11 // pred_region
          %s189 = ssub.s32 2048, 2048
          %190 = vsyncadd [#allocation6], %s189
          %s191 = sshll.u32 [#allocation7], 4
          %s192 = int_to_ptr.vmem [resolvable:$true] %s191
          %197 = dma.hbm_to_vmem [thread:$0]  %s3, 2048, %s192, [#allocation6], 128, 128, 8
        $region24: #{tpu_custom_call.1} parent=11 // pred_fallthru
          _
        // Predicated region
        $region25: #{tpu_custom_call.1} parent=11 // pred_check
          %p198 = pneg %p128
        $region26: #{tpu_custom_call.1} parent=11 // pred_check_branch
          %200 = sbr.rel (%p198) target = $region28
        $region27: #{tpu_custom_call.1} parent=11 // pred_region
          _
        $region28: #{tpu_custom_call.1} parent=11 // pred_fallthru
          _
      $region12: #{tpu_custom_call.1} parent=5 // pred_fallthru
        _
      %p201 = scmp.lt.s32.totalorder %s18, 2
      // Predicated region
      $region29: #{tpu_custom_call.1} parent=5 // pred_check
        %p202 = pneg %p201
      $region30: #{tpu_custom_call.1} parent=5 // pred_check_branch
        %204 = sbr.rel (%p202) target = $region32
      $region31: #{tpu_custom_call.1} parent=5 // pred_region
        // Predicated region
        $region33: #{tpu_custom_call.1} parent=31 // pred_check
          %p205 = pneg %p38
        $region34: #{tpu_custom_call.1} parent=31 // pred_check_branch
          %207 = sbr.rel (%p205) target = $region36
        $region35: #{tpu_custom_call.1} parent=31 // pred_region
          %s208 = sand.u32 %s28, 1
          %s209 = scalar_lea.sflag [#allocation3], %s208
          %s210 = sand.u32 %s28, 1
          %s211 = smul.addr %s210, 24
          %s212 = scalar_lea.vmem [#allocation2], %s211
          %s213 = smul.u32 3, %s18
          %s214 = ssub.s32 5, %s213
          %p215 = scmp.lt.s32.totalorder %s214, 3
          %s216 = scalar_select %p215, %s214, 3
          %s217 = smul.u32 128, %s216
          %s219 = ssub.s32 384, %s217
          %220 = vsyncadd %s209, %s219
          %p221 = scmp.ne.s32.totalorder 0, %s217
          %s222 = smul.addr %s213, 128
          %s223 = scalar_lea.hbm %s0, %s222
          %s224 = smul.u32 8, %s216
          %s225 = sshll.u32 %s212, 4
          %s226 = int_to_ptr.vmem [resolvable:$true] %s225
          %s227 = sshll.u32 %s224, 4
          %231 = dma.hbm_to_vmem [thread:$0]  (%p221), %s223, %s227, %s226, %s209, 128, 128, 8
        $region36: #{tpu_custom_call.1} parent=31 // pred_fallthru
          _
      $region32: #{tpu_custom_call.1} parent=5 // pred_fallthru
        _
      %p232 = scmp.le.s32.totalorder 1, %s18
      %p233 = scmp.lt.s32.totalorder %s18, 3
      %p234 = pnand %p232, %p233
      %p235 = pneg %p234
      // Predicated region
      $region37: #{tpu_custom_call.1} parent=5 // pred_check
        _
      $region38: #{tpu_custom_call.1} parent=5 // pred_check_branch
        %237 = sbr.rel (%p234) target = $region40
      $region39: #{tpu_custom_call.1} parent=5 // pred_region
        %s238 = ssub.s32 %s18, 1
        %s239 = sand.u32 %s31, 1
        %s240 = scalar_lea.sflag [#allocation3], %s239
        %s241 = sand.u32 %s31, 1
        %s242 = smul.addr %s241, 24
        %s243 = scalar_lea.vmem [#allocation2], %s242
        // Predicated region
        $region41: #{tpu_custom_call.1} parent=39 // pred_check
          %p244 = pneg %p44
        $region42: #{tpu_custom_call.1} parent=39 // pred_check_branch
          %246 = sbr.rel (%p244) target = $region44
        $region43: #{tpu_custom_call.1} parent=39 // pred_region
          %247 = dma.done %s240, 384
        $region44: #{tpu_custom_call.1} parent=39 // pred_fallthru
          _
        // Predicated region
        $region45: #{tpu_custom_call.1} parent=39 // pred_check
          %p248 = pneg %p65
        $region46: #{tpu_custom_call.1} parent=39 // pred_check_branch
          %250 = sbr.rel (%p248) target = $region48
        $region47: #{tpu_custom_call.1} parent=39 // pred_region
          %251 = dma.done [#allocation6], 2048
        $region48: #{tpu_custom_call.1} parent=39 // pred_fallthru
          _
        // Predicated region
        $region49: #{tpu_custom_call.1} parent=39 // pred_check
          %p252 = pneg %p107
        $region50: #{tpu_custom_call.1} parent=39 // pred_check_branch
          %254 = sbr.rel (%p252) target = $region52
        $region51: #{tpu_custom_call.1} parent=39 // pred_region
          %255 = dma.done [#allocation6], 2048
        $region52: #{tpu_custom_call.1} parent=39 // pred_fallthru
          _
        %s256 = sand.u32 %s31, 1
        %s257 = scalar_lea.sflag [#allocation3], %s256
        %s258 = sand.u32 %s31, 1
        %s259 = smul.addr %s258, 24
        %s260 = scalar_lea.vmem [#allocation2], %s259
        %p261 = pneg %p44
        %p262 = pneg %p41
        %p263 = pneg %p65
        %p264 = pneg %p62
        %p265 = pneg %p86
        %p266 = pneg %p83
        %p267 = pneg %p107
        %p268 = pneg %p104
        %p269 = pneg %p128
        %p270 = pneg %p125
        %p271 = pneg %p154
        %p272 = pneg %p151
        %s273 = sand.u32 %s141, 1
        %s274 = scalar_lea.sflag [#allocation4], %s273
        %s275 = sand.u32 %s141, 1
        %s276 = smul.addr %s275, 24
        %s277 = scalar_lea.vmem [#allocation8], %s276
        %s278 = smul.u32 3, %s23
        %s279 = ssub.s32 5, %s278
        %p280 = scmp.lt.s32.totalorder %s279, 3
        %s281 = scalar_select %p280, %s279, 3
        %s282 = smul.u32 128, %s281
        %s283 = smul.u32 3, %s23
        %s284 = ssub.s32 5, %s283
        %p285 = scmp.lt.s32.totalorder %s284, 3
        %s286 = scalar_select %p285, %s284, 3
        %s287 = smul.u32 128, %s286
        %v288 = vld [vmem:[%s243] sm:$0xff]
        %v289 = vld [vmem:[%s243 + $0x8] sm:$0xff]
        %v290 = vld [vmem:[%s243 + $0x10] sm:$0xff]
        %v291 = vld [vmem:[#allocation5] sm:$0xff]
        %v292 = vld [vmem:[#allocation5 + $0x8] sm:$0xff]
        %v293 = vld [vmem:[#allocation5 + $0x10] sm:$0xff]
        %v294 = vld [vmem:[#allocation5 + $0x18] sm:$0xff]
        %v295 = vld [vmem:[#allocation5 + $0x20] sm:$0xff]
        %v296 = vld [vmem:[#allocation5 + $0x28] sm:$0xff]
        %v297 = vld [vmem:[#allocation5 + $0x30] sm:$0xff]
        %v298 = vld [vmem:[#allocation5 + $0x38] sm:$0xff]
        %v299 = vld [vmem:[#allocation5 + $0x40] sm:$0xff]
        %v300 = vld [vmem:[#allocation5 + $0x48] sm:$0xff]
        %v301 = vld [vmem:[#allocation5 + $0x50] sm:$0xff]
        %v302 = vld [vmem:[#allocation5 + $0x58] sm:$0xff]
        %v303 = vld [vmem:[#allocation5 + $0x60] sm:$0xff]
        %v304 = vld [vmem:[#allocation5 + $0x68] sm:$0xff]
        %v305 = vld [vmem:[#allocation5 + $0x70] sm:$0xff]
        %v306 = vld [vmem:[#allocation5 + $0x78] sm:$0xff]
        %v307 = vld [vmem:[%s2] sm:$0x1]
        %v309 = vlaneseq
        %v310 = vshrl.u32 %v309, 7
        %v311 = vsub.s32 0, %v310
        %v312 = vrot.slane %v307, %v311
        %314 = vmatprep.subr.mxu0 0.0
        %315 = vmatpush1.msra.mxu0 %v291
        %316 = vmatprep.subr.mxu0 0.0
        %317 = vmatpush1.msra.mxu0 %v292
        %318 = vmatprep.subr.mxu0 0.0
        %319 = vmatpush1.msra.mxu0 %v293
        %320 = vmatprep.subr.mxu0 0.0
        %321 = vmatpush1.msra.mxu0 %v294
        %322 = vmatprep.subr.mxu0 0.0
        %323 = vmatpush1.msra.mxu0 %v295
        %324 = vmatprep.subr.mxu0 0.0
        %325 = vmatpush1.msra.mxu0 %v296
        %326 = vmatprep.subr.mxu0 0.0
        %327 = vmatpush1.msra.mxu0 %v297
        %328 = vmatprep.subr.mxu0 0.0
        %329 = vmatpush1.msra.mxu0 %v298
        %330 = vmatprep.subr.mxu0 0.0
        %331 = vmatpush1.msra.mxu0 %v299
        %332 = vmatprep.subr.mxu0 0.0
        %333 = vmatpush1.msra.mxu0 %v300
        %334 = vmatprep.subr.mxu0 0.0
        %335 = vmatpush1.msra.mxu0 %v301
        %336 = vmatprep.subr.mxu0 0.0
        %337 = vmatpush1.msra.mxu0 %v302
        %338 = vmatprep.subr.mxu0 0.0
        %339 = vmatpush1.msra.mxu0 %v303
        %340 = vmatprep.subr.mxu0 0.0
        %341 = vmatpush1.msra.mxu0 %v304
        %342 = vmatprep.subr.mxu0 0.0
        %343 = vmatpush1.msra.mxu0 %v305
        %344 = vmatprep.subr.mxu0 0.0
        %345 = vmatpush1.msra.mxu0 %v306
        %346 = vmatprep.subr.mxu0 0.0
        %347 = vmatpush1.msra.mxu0 0.0
        %348 = vmatprep.subr.mxu0 0.0
        %349 = vmatpush1.msra.mxu0 0.0
        %350 = vmatprep.subr.mxu0 0.0
        %351 = vmatpush1.msra.mxu0 0.0
        %352 = vmatprep.subr.mxu0 0.0
        %353 = vmatpush1.msra.mxu0 0.0
        %354 = vmatprep.subr.mxu0 0.0
        %355 = vmatpush1.msra.mxu0 0.0
        %356 = vmatprep.subr.mxu0 0.0
        %357 = vmatpush1.msra.mxu0 0.0
        %358 = vmatprep.subr.mxu0 0.0
        %359 = vmatpush1.msra.mxu0 0.0
        %360 = vmatprep.subr.mxu0 0.0
        %361 = vmatpush1.msra.mxu0 0.0
        %362 = vmatprep.subr.mxu0 0.0
        %363 = vmatpush1.msra.mxu0 0.0
        %364 = vmatprep.subr.mxu0 0.0
        %365 = vmatpush1.msra.mxu0 0.0
        %366 = vmatprep.subr.mxu0 0.0
        %367 = vmatpush1.msra.mxu0 0.0
        %368 = vmatprep.subr.mxu0 0.0
        %369 = vmatpush1.msra.mxu0 0.0
        %370 = vmatprep.subr.mxu0 0.0
        %371 = vmatpush1.msra.mxu0 0.0
        %372 = vmatprep.subr.mxu0 0.0
        %373 = vmatpush1.msra.mxu0 0.0
        %374 = vmatprep.subr.mxu0 0.0
        %375 = vmatpush1.msra.mxu0 0.0
        %376 = vmatprep.subr.mxu0 0.0
        %377 = vmatpush1.msra.mxu0 0.0
        %378 = vmatprep.mubr.f32.mxu0 0.0
        %379 = vmatmul.mubr.f32.gmra.mrb[0].mxu0 %v288
        %v380 = vpop.f32.mrb[0].mxu0
        %v381 = vadd.f32 %v312, %v380
        %v382 = vpop.f32.mrb[0].mxu0
        %383 = vmatprep.mubr.f32.mxu0 0.0
        %384 = vmatmul.mubr.f32.gmra.mrb[0].mxu0 %v289
        %v385 = vpop.f32.mrb[0].mxu0
        %v386 = vadd.f32 %v312, %v385
        %v387 = vpop.f32.mrb[0].mxu0
        %388 = vmatprep.mubr.f32.mxu0 0.0
        %389 = vmatmul.mubr.f32.gmra.mrb[0].mxu0 %v290
        %v390 = vpop.f32.mrb[0].mxu0
        %v391 = vadd.f32 %v312, %v390
        %v392 = vpop.f32.mrb[0].mxu0
        %393 = vdwg.mxu0
        %v394 = vmin.f32 %v381, 20.0
        %v395 = vmin.f32 %v386, 20.0
        %v396 = vmin.f32 %v391, 20.0
        %v397 = vmul.f32 %v394, 1.442695
        %v398 = vpow.pop %v397
        %v399 = vmul.f32 %v395, 1.442695
        %v400 = vpow.pop %v399
        %v401 = vmul.f32 %v396, 1.442695
        %v402 = vpow.pop %v401
        %v403 = vadd.f32 %v398, 2.0
        %v404 = vadd.f32 %v400, 2.0
        %v405 = vadd.f32 %v402, 2.0
        %v406 = vmul.f32 %v398, %v403
        %v407 = vmul.f32 %v400, %v404
        %v408 = vmul.f32 %v402, %v405
        %v409 = vadd.f32 %v406, 2.0
        %v410 = vadd.f32 %v407, 2.0
        %v411 = vadd.f32 %v408, 2.0
        %v412 = vrcp.pop %v409
        %v413 = vrcp.pop %v410
        %v414 = vrcp.pop %v411
        %v415 = vmul.f32 %v409, %v412
        %v416 = vmul.f32 %v410, %v413
        %v417 = vmul.f32 %v411, %v414
        %v418 = vsub.f32 2.0, %v415
        %v419 = vsub.f32 2.0, %v416
        %v420 = vsub.f32 2.0, %v417
        %v421 = vmul.f32 %v412, %v418
        %v422 = vmul.f32 %v413, %v419
        %v423 = vmul.f32 %v414, %v420
        %v424 = vmul.f32 %v381, %v406
        %v425 = vmul.f32 %v386, %v407
        %v426 = vmul.f32 %v391, %v408
        %v427 = vmul.f32 %v424, %v421
        %v428 = vmul.f32 %v425, %v422
        %v429 = vmul.f32 %v426, %v423
        %v430 = vld [vmem:[#allocation7] sm:$0xff]
        %v431 = vld [vmem:[#allocation7 + $0x8] sm:$0xff]
        %v432 = vld [vmem:[#allocation7 + $0x10] sm:$0xff]
        %v433 = vld [vmem:[#allocation7 + $0x18] sm:$0xff]
        %v434 = vld [vmem:[#allocation7 + $0x20] sm:$0xff]
        %v435 = vld [vmem:[#allocation7 + $0x28] sm:$0xff]
        %v436 = vld [vmem:[#allocation7 + $0x30] sm:$0xff]
        %v437 = vld [vmem:[#allocation7 + $0x38] sm:$0xff]
        %v438 = vld [vmem:[#allocation7 + $0x40] sm:$0xff]
        %v439 = vld [vmem:[#allocation7 + $0x48] sm:$0xff]
        %v440 = vld [vmem:[#allocation7 + $0x50] sm:$0xff]
        %v441 = vld [vmem:[#allocation7 + $0x58] sm:$0xff]
        %v442 = vld [vmem:[#allocation7 + $0x60] sm:$0xff]
        %v443 = vld [vmem:[#allocation7 + $0x68] sm:$0xff]
        %v444 = vld [vmem:[#allocation7 + $0x70] sm:$0xff]
        %v445 = vld [vmem:[#allocation7 + $0x78] sm:$0xff]
        %v446 = vld [vmem:[%s4] sm:$0x1]
        %v448 = vlaneseq
        %v449 = vshrl.u32 %v448, 7
        %v450 = vsub.s32 0, %v449
        %v451 = vrot.slane %v446, %v450
        %453 = vmatprep.subr.mxu0 0.0
        %454 = vmatpush1.msra.mxu0 %v430
        %455 = vmatprep.subr.mxu0 0.0
        %456 = vmatpush1.msra.mxu0 %v431
        %457 = vmatprep.subr.mxu0 0.0
        %458 = vmatpush1.msra.mxu0 %v432
        %459 = vmatprep.subr.mxu0 0.0
        %460 = vmatpush1.msra.mxu0 %v433
        %461 = vmatprep.subr.mxu0 0.0
        %462 = vmatpush1.msra.mxu0 %v434
        %463 = vmatprep.subr.mxu0 0.0
        %464 = vmatpush1.msra.mxu0 %v435
        %465 = vmatprep.subr.mxu0 0.0
        %466 = vmatpush1.msra.mxu0 %v436
        %467 = vmatprep.subr.mxu0 0.0
        %468 = vmatpush1.msra.mxu0 %v437
        %469 = vmatprep.subr.mxu0 0.0
        %470 = vmatpush1.msra.mxu0 %v438
        %471 = vmatprep.subr.mxu0 0.0
        %472 = vmatpush1.msra.mxu0 %v439
        %473 = vmatprep.subr.mxu0 0.0
        %474 = vmatpush1.msra.mxu0 %v440
        %475 = vmatprep.subr.mxu0 0.0
        %476 = vmatpush1.msra.mxu0 %v441
        %477 = vmatprep.subr.mxu0 0.0
        %478 = vmatpush1.msra.mxu0 %v442
        %479 = vmatprep.subr.mxu0 0.0
        %480 = vmatpush1.msra.mxu0 %v443
        %481 = vmatprep.subr.mxu0 0.0
        %482 = vmatpush1.msra.mxu0 %v444
        %483 = vmatprep.subr.mxu0 0.0
        %484 = vmatpush1.msra.mxu0 %v445
        %485 = vmatprep.subr.mxu0 0.0
        %486 = vmatpush1.msra.mxu0 0.0
        %487 = vmatprep.subr.mxu0 0.0
        %488 = vmatpush1.msra.mxu0 0.0
        %489 = vmatprep.subr.mxu0 0.0
        %490 = vmatpush1.msra.mxu0 0.0
        %491 = vmatprep.subr.mxu0 0.0
        %492 = vmatpush1.msra.mxu0 0.0
        %493 = vmatprep.subr.mxu0 0.0
        %494 = vmatpush1.msra.mxu0 0.0
        %495 = vmatprep.subr.mxu0 0.0
        %496 = vmatpush1.msra.mxu0 0.0
        %497 = vmatprep.subr.mxu0 0.0
        %498 = vmatpush1.msra.mxu0 0.0
        %499 = vmatprep.subr.mxu0 0.0
        %500 = vmatpush1.msra.mxu0 0.0
        %501 = vmatprep.subr.mxu0 0.0
        %502 = vmatpush1.msra.mxu0 0.0
        %503 = vmatprep.subr.mxu0 0.0
        %504 = vmatpush1.msra.mxu0 0.0
        %505 = vmatprep.subr.mxu0 0.0
        %506 = vmatpush1.msra.mxu0 0.0
        %507 = vmatprep.subr.mxu0 0.0
        %508 = vmatpush1.msra.mxu0 0.0
        %509 = vmatprep.subr.mxu0 0.0
        %510 = vmatpush1.msra.mxu0 0.0
        %511 = vmatprep.subr.mxu0 0.0
        %512 = vmatpush1.msra.mxu0 0.0
        %513 = vmatprep.subr.mxu0 0.0
        %514 = vmatpush1.msra.mxu0 0.0
        %515 = vmatprep.subr.mxu0 0.0
        %516 = vmatpush1.msra.mxu0 0.0
        %517 = vmatprep.mubr.f32.mxu0 0.0
        %518 = vmatmul.mubr.f32.gmra.mrb[0].mxu0 %v427
        %v519 = vpop.f32.mrb[0].mxu0
        %v520 = vadd.f32 %v451, %v519
        %v521 = vpop.f32.mrb[0].mxu0
        %522 = vmatprep.mubr.f32.mxu0 0.0
        %523 = vmatmul.mubr.f32.gmra.mrb[0].mxu0 %v428
        %v524 = vpop.f32.mrb[0].mxu0
        %v525 = vadd.f32 %v451, %v524
        %v526 = vpop.f32.mrb[0].mxu0
        %527 = vmatprep.mubr.f32.mxu0 0.0
        %528 = vmatmul.mubr.f32.gmra.mrb[0].mxu0 %v429
        %v529 = vpop.f32.mrb[0].mxu0
        %v530 = vadd.f32 %v451, %v529
        %v531 = vpop.f32.mrb[0].mxu0
        %532 = vdwg.mxu0
        %v533 = vadd.f32 %v288, %v520
        %v534 = vadd.f32 %v289, %v525
        %v535 = vadd.f32 %v290, %v530
        %536 = vst [vmem:[%s277] sm:$0xff] %v533
        %537 = vst [vmem:[%s277 + $0x8] sm:$0xff] %v534
        %538 = vst [vmem:[%s277 + $0x10] sm:$0xff] %v535
        %s539 = sand.u32 %s141, 1
        %s540 = scalar_lea.sflag [#allocation4], %s539
        %s541 = sand.u32 %s141, 1
        %s542 = smul.addr %s541, 24
        %s543 = scalar_lea.vmem [#allocation8], %s542
        // Predicated region
        $region53: #{tpu_custom_call.1} parent=39 // pred_check
          %p544 = pneg %p151
        $region54: #{tpu_custom_call.1} parent=39 // pred_check_branch
          %546 = sbr.rel (%p544) target = $region56
        $region55: #{tpu_custom_call.1} parent=39 // pred_region
          %s547 = smul.u32 3, %s23
          %s548 = ssub.s32 5, %s547
          %p549 = scmp.lt.s32.totalorder %s548, 3
          %s550 = scalar_select %p549, %s548, 3
          %s551 = smul.u32 128, %s550
          %s553 = ssub.s32 384, %s551
          %554 = vsyncadd %s540, %s553
          %p555 = scmp.ne.s32.totalorder 0, %s551
          %s556 = smul.addr %s547, 128
          %s557 = scalar_lea.hbm %s5, %s556
          %s558 = smul.u32 8, %s550
          %s559 = sshll.u32 %s543, 4
          %s560 = int_to_ptr.vmem [resolvable:$true] %s559
          %s561 = sshll.u32 %s558, 4
          %565 = dma.vmem_to_hbm [thread:$0]  (%p555), %s560, %s561, %s557, %s540, 128, 128, 8
        $region56: #{tpu_custom_call.1} parent=39 // pred_fallthru
          _
      $region40: #{tpu_custom_call.1} parent=5 // pred_fallthru
        _
      %p566 = scmp.le.s32.totalorder 2, %s18
      // Predicated region
      $region57: #{tpu_custom_call.1} parent=5 // pred_check
        %p567 = pneg %p566
      $region58: #{tpu_custom_call.1} parent=5 // pred_check_branch
        %569 = sbr.rel (%p567) target = $region60
      $region59: #{tpu_custom_call.1} parent=5 // pred_region
        %s570 = ssub.s32 %s18, 2
        // Predicated region
        $region61: #{tpu_custom_call.1} parent=59 // pred_check
          %p571 = pneg %p157
        $region62: #{tpu_custom_call.1} parent=59 // pred_check_branch
          %573 = sbr.rel (%p571) target = $region64
        $region63: #{tpu_custom_call.1} parent=59 // pred_region
          %s574 = sand.u32 %s142, 1
          %s575 = scalar_lea.sflag [#allocation4], %s574
          %s576 = sand.u32 %s142, 1
          %s577 = smul.addr %s576, 24
          %s578 = scalar_lea.vmem [#allocation8], %s577
          %579 = dma.done %s575, 384
        $region64: #{tpu_custom_call.1} parent=59 // pred_fallthru
          _
      $region60: #{tpu_custom_call.1} parent=5 // pred_fallthru
        _
    $region6: #{tpu_custom_call.1} parent=1 // loop_footer
      %s22 = sadd.s32 1, %s18
    $region7: #{tpu_custom_call.1} parent=1 // loop_footer_branch
      %17 = sbr.rel target = $region3
    $region8: #{tpu_custom_call.1} parent=1 // loop_exit
      _
    %580 = vsyncpa [#allocation3], 1
    %s581 = scalar_lea.sflag [#allocation3], 1
    %582 = vsyncpa %s581, 1
    %583 = vsyncpa [#allocation6], 1
    %584 = vsyncpa [#allocation4], 1
    %s585 = scalar_lea.sflag [#allocation4], 1
    %586 = vsyncpa %s585, 1

</llo_original>
